<compile_context>
chip_gen: v6e
topology: v6e:2x2x1
jax: 0.10.0
libtpu: 0.0.40
codegen_flags: <defaults>
</compile_context>

<pallas_src>
import functools
import math

import jax
import jax.numpy as jnp
from jax.experimental import pallas as pl
from jax.experimental.pallas import tpu as pltpu

LANE = 128


# ----------------------------------------------------------------------------
# Pallas kernels
# ----------------------------------------------------------------------------
def quant_matmul_kernel(x_ref, w_ref, b_ref, scales_ref, o_ref, *, abits, act):
    """Fake-quantize activations (uniform affine) and matmul against pre-dequantized
    bf16 weights on the MXU (f32 accumulation)."""
    inv_a_delta = scales_ref[0]
    a_delta = scales_ref[1]
    a_zp = scales_ref[2]
    a_levels = float(2 ** abits - 1)

    x = x_ref[...]
    x_q = jnp.clip(jnp.round(x * inv_a_delta) + a_zp, 0.0, a_levels)
    x_dq = ((x_q - a_zp) * a_delta).astype(jnp.bfloat16)

    y = jnp.dot(x_dq, w_ref[...], preferred_element_type=jnp.float32) + b_ref[...]
    if act == "silu":
        y = y * jax.nn.sigmoid(y)
    elif act == "gelu":
        y = jax.nn.gelu(y, approximate=True)
    o_ref[...] = y


def quant_attn_kernel(q_ref, k_ref, v_ref, scales_ref, o_ref, *, abits, sm_abit, scale):
    """Quantized attention over all (batch*heads) at once: fake-quantize q/k/v,
    softmax (approx-reciprocal denom), quantize softmax probs to sm_abit bits."""
    a_levels = float(2 ** abits - 1)
    sm_levels = float(2 ** sm_abit - 1)
    sm_delta = 1.0 / sm_levels

    def fq(x, inv_d, d, z):
        xq = jnp.clip(jnp.round(x * inv_d) + z, 0.0, a_levels)
        return ((xq - z) * d).astype(jnp.bfloat16)

    q = fq(q_ref[...], scales_ref[0], scales_ref[1], scales_ref[2])
    k = fq(k_ref[...], scales_ref[3], scales_ref[4], scales_ref[5])
    v = fq(v_ref[...], scales_ref[6], scales_ref[7], scales_ref[8])

    s = jnp.einsum("bqd,bkd->bqk", q, k, preferred_element_type=jnp.float32) * scale
    m = jnp.max(s, axis=-1, keepdims=True)
    e = jnp.exp(s - m)
    denom = jnp.sum(e, axis=-1, keepdims=True)
    p = e * pl.reciprocal(denom, approx=True)

    # quantize softmax probabilities (act_quantizer_w, sm_abit bits, fixed [0, 1] range)
    p_q = (jnp.clip(jnp.round(p * sm_levels), 0.0, sm_levels) * sm_delta).astype(jnp.bfloat16)

    o_ref[...] = jnp.einsum("bqk,bkd->bqd", p_q, v, preferred_element_type=jnp.float32)


# ----------------------------------------------------------------------------
# Wrappers (glue in plain JAX; hot path in the kernels above)
# ----------------------------------------------------------------------------
def affine_qparams(x, bits):
    """Per-tensor uniform affine activation qparams (calibration / running-stat stand-in)."""
    x_min = jnp.minimum(jnp.min(x), 0.0)
    x_max = jnp.maximum(jnp.max(x), 0.0)
    delta = jnp.maximum((x_max - x_min) / (2 ** bits - 1), 1e-8)
    zp = jnp.round(-x_min / delta)
    return delta, zp


def quant_linear(x2d, layer, *, abits=8, act=None):
    """Fake-quantized linear on 2-D input: (M, K) @ (K, Np) + (Np,), sliced to true N.

    `layer` holds pre-dequantized bf16 weights (K, Np) padded to a lane-dense Np.
    """
    M, K = x2d.shape
    w, b, N = layer["w"], layer["b"], layer["n"]
    Np = w.shape[1]

    a_delta, a_zp = affine_qparams(x2d, abits)
    scales = jnp.stack([1.0 / a_delta, a_delta, a_zp]).astype(jnp.float32)

    # Whole-M block when it fits; otherwise 256-row tiles (no explicit pad needed for
    # the shapes in this model).
    tm = M if M <= 256 else 256
    Mp = ((M + tm - 1) // tm) * tm
    x_in = x2d if Mp == M else jnp.pad(x2d, ((0, Mp - M), (0, 0)))

    out = pl.pallas_call(
        functools.partial(quant_matmul_kernel, abits=abits, act=act),
        out_shape=jax.ShapeDtypeStruct((Mp, Np), jnp.float32),
        grid=(Mp // tm,),
        in_specs=[
            pl.BlockSpec((tm, K), lambda i: (i, 0)),
            pl.BlockSpec((K, Np), lambda i: (0, 0)),
            pl.BlockSpec((1, Np), lambda i: (0, 0)),
            pl.BlockSpec(memory_space=pltpu.MemorySpace.SMEM),
        ],
        out_specs=pl.BlockSpec((tm, Np), lambda i: (i, 0)),
        compiler_params=pltpu.CompilerParams(dimension_semantics=("parallel",)),
    )(x_in, w, b, scales)
    # TODO(synk): at real U-Net sizes (K up to ~11k, N up to 1280) add a K-grid axis with
    # an f32 VMEM accumulator and explicit vmem_limit_bytes (v7x has 64 MiB VMEM).
    if Mp != M or Np != N:
        out = out[:M, :N]
    return out


def quant_linear_nd(x, layer, **kw):
    lead = x.shape[:-1]
    y = quant_linear(x.reshape(-1, x.shape[-1]), layer, **kw)
    return y.reshape(*lead, y.shape[-1])


def im2col_nhwc(x, kh, kw, pad):
    # x: NHWC -> (B*H*W, kh*kw*C); tap-major (i, j, c) flattening matches the weight
    # matrix layout prepared in make_conv.
    B, H, W, C = x.shape
    xp = jnp.pad(x, ((0, 0), (pad, pad), (pad, pad), (0, 0)))
    patches = [xp[:, i:i + H, j:j + W, :] for i in range(kh) for j in range(kw)]
    p = jnp.stack(patches, axis=3)                       # (B, H, W, kh*kw, C)
    return p.reshape(B * H * W, kh * kw * C)


def quant_conv2d(x, layer, *, abits=8, act=None):
    """Fake-quantized Conv2d, stride 1, 'same' padding. x: NHWC."""
    B, H, W, C = x.shape
    ksz = layer["k"]
    cols = im2col_nhwc(x, ksz, ksz, ksz // 2)            # (B*H*W, kh*kw*Cin)
    y = quant_linear(cols, layer, abits=abits, act=act)  # (B*H*W, Cout)
    return y.reshape(B, H, W, y.shape[-1])


def quant_attention(q, k, v, *, heads, abits=8, sm_abit=8):
    B, Sq, Dm = q.shape
    Skv = k.shape[1]
    d = Dm // heads
    dp = LANE  # pad head_dim to a full lane: dense loads/stores + proper MXU contraction

    # Per-tensor activation qparams (invariant to the head reshape, so compute here once).
    q_d, q_z = affine_qparams(q, abits)
    k_d, k_z = affine_qparams(k, abits)
    v_d, v_z = affine_qparams(v, abits)
    scales = jnp.stack([1.0 / q_d, q_d, q_z,
                        1.0 / k_d, k_d, k_z,
                        1.0 / v_d, v_d, v_z]).astype(jnp.float32)

    def split_pad(t, S):
        t = t.reshape(B, S, heads, d).transpose(0, 2, 1, 3).reshape(B * heads, S, d)
        # zero-padding is exact under affine fake-quant (0 -> zp -> 0)
        return jnp.pad(t, ((0, 0), (0, 0), (0, dp - d)))

    qh, kh, vh = split_pad(q, Sq), split_pad(k, Skv), split_pad(v, Skv)
    BH = B * heads

    out = pl.pallas_call(
        functools.partial(quant_attn_kernel, abits=abits, sm_abit=sm_abit,
                          scale=1.0 / math.sqrt(d)),
        out_shape=jax.ShapeDtypeStruct((BH, Sq, dp), jnp.float32),
        grid=(1,),
        in_specs=[
            pl.BlockSpec((BH, Sq, dp), lambda i: (0, 0, 0)),
            pl.BlockSpec((BH, Skv, dp), lambda i: (0, 0, 0)),
            pl.BlockSpec((BH, Skv, dp), lambda i: (0, 0, 0)),
            pl.BlockSpec(memory_space=pltpu.MemorySpace.SMEM),
        ],
        out_specs=pl.BlockSpec((BH, Sq, dp), lambda i: (0, 0, 0)),
    )(qh, kh, vh, scales)
    out = out[:, :, :d]
    return out.reshape(B, heads, Sq, d).transpose(0, 2, 1, 3).reshape(B, Sq, Dm)


# ----------------------------------------------------------------------------
# Parameter construction: weights fake-quantized ONCE at init (per-module qparams),
# stored pre-dequantized in bf16, fused + padded lane-dense.
# ----------------------------------------------------------------------------
def fake_quant_weight(w, bits):
    w_min = jnp.minimum(jnp.min(w), 0.0)
    w_max = jnp.maximum(jnp.max(w), 0.0)
    delta = jnp.maximum((w_max - w_min) / (2 ** bits - 1), 1e-8)
    zp = jnp.round(-w_min / delta)
    wq = jnp.clip(jnp.round(w / delta) + zp, 0.0, float(2 ** bits - 1))
    return (wq - zp) * delta


def _pad_lane(n):
    return ((n + LANE - 1) // LANE) * LANE


def pack_linear(ws, bs, wbits):
    """Quantize each weight with its own per-tensor params (per-QuantModule semantics),
    then fuse along the output dim and pad it to a lane-dense multiple of 128."""
    w_dq = jnp.concatenate([fake_quant_weight(w, wbits) for w in ws], axis=1)
    b = jnp.concatenate(bs, axis=0)
    K, N = w_dq.shape
    Np = _pad_lane(N)
    return {
        "w": jnp.pad(w_dq, ((0, 0), (0, Np - N))).astype(jnp.bfloat16),
        "b": jnp.pad(b, (0, Np - N)).reshape(1, Np).astype(jnp.float32),
        "n": N,
    }


def make_conv(key, cout, cin, ksz, wbits):
    w = jax.random.normal(key, (cout, cin, ksz, ksz), jnp.float32) / math.sqrt(cin * ksz * ksz)
    b = jnp.zeros((cout,), jnp.float32)
    w_dq = fake_quant_weight(w, wbits)
    # (Cout, Cin, kh, kw) -> (kh*kw*Cin, Cout): matches NHWC im2col tap-major order.
    w_mat = w_dq.transpose(2, 3, 1, 0).reshape(ksz * ksz * cin, cout)
    Np = _pad_lane(cout)
    return {
        "w": jnp.pad(w_mat, ((0, 0), (0, Np - cout))).astype(jnp.bfloat16),
        "b": jnp.pad(b, (0, Np - cout)).reshape(1, Np).astype(jnp.float32),
        "n": cout,
        "k": ksz,
    }


def init_params(key, wbits=8):
    def dense(k, fi, fo):
        w = jax.random.normal(k, (fi, fo), jnp.float32) / math.sqrt(fi)
        b = jnp.zeros((fo,), jnp.float32)
        return w, b

    ks = jax.random.split(key, 17)
    p = {}
    w, b = dense(ks[0], 32, 32); p["temb1"] = pack_linear([w], [b], wbits)
    w, b = dense(ks[1], 32, 32); p["temb2"] = pack_linear([w], [b], wbits)
    p["conv_in"] = make_conv(ks[2], 8, 4, 3, wbits)
    w, b = dense(ks[3], 32, 8); p["temb_proj"] = pack_linear([w], [b], wbits)
    p["conv_res"] = make_conv(ks[4], 8, 8, 3, wbits)
    p["conv_skip"] = make_conv(ks[5], 8, 4, 1, wbits)

    wq1, bq1 = dense(ks[6], 8, 8)
    wk1, bk1 = dense(ks[7], 8, 8)
    wv1, bv1 = dense(ks[8], 8, 8)
    p["to_qkv1"] = pack_linear([wq1, wk1, wv1], [bq1, bk1, bv1], wbits)   # fused q/k/v
    w, b = dense(ks[9], 8, 8); p["to_out1"] = pack_linear([w], [b], wbits)

    w, b = dense(ks[10], 8, 8); p["to_q2"] = pack_linear([w], [b], wbits)
    wk2, bk2 = dense(ks[11], 16, 8)
    wv2, bv2 = dense(ks[12], 16, 8)
    p["to_kv2"] = pack_linear([wk2, wv2], [bk2, bv2], wbits)              # fused k/v
    w, b = dense(ks[13], 8, 8); p["to_out2"] = pack_linear([w], [b], wbits)

    w, b = dense(ks[14], 8, 16); p["ff1"] = pack_linear([w], [b], wbits)
    w, b = dense(ks[15], 16, 8); p["ff2"] = pack_linear([w], [b], wbits)
    p["conv_out"] = make_conv(ks[16], 4, 8, 3, wbits)
    return p


# ----------------------------------------------------------------------------
# Synthetic quantized U-Net (QuantModel.forward -> self.model(x, timesteps, context))
# ----------------------------------------------------------------------------
def layer_norm(x, eps=1e-5):
    m = jnp.mean(x, axis=-1, keepdims=True)
    v = jnp.var(x, axis=-1, keepdims=True)
    return (x - m) / jnp.sqrt(v + eps)


def timestep_embedding(t, dim):
    half = dim // 2
    freqs = jnp.exp(-math.log(10000.0) * jnp.arange(half, dtype=jnp.float32) / half)
    args = t.astype(jnp.float32)[:, None] * freqs[None, :]
    return jnp.concatenate([jnp.cos(args), jnp.sin(args)], axis=-1)


def quant_model_forward(params, x, timesteps, context, *, sm_abit=8, a_bits=8):
    """QuantModel.forward(x, timesteps, context) for the synthetic quantized u_net."""
    B, C, H, W = x.shape
    xh = x.transpose(0, 2, 3, 1)          # NCHW -> NHWC once; internals are channels-last

    # --- time embedding (QuantModule linears) ---
    temb = timestep_embedding(timesteps, 32)
    temb = quant_linear(temb, params["temb1"], abits=a_bits, act="silu")
    temb = quant_linear(temb, params["temb2"], abits=a_bits)

    # --- QuantResBlock ---
    h = quant_conv2d(xh, params["conv_in"], abits=a_bits, act="silu")
    t_proj = quant_linear(jax.nn.silu(temb), params["temb_proj"], abits=a_bits)
    h = h + t_proj[:, None, None, :]
    h = jax.nn.silu(h)
    h = quant_conv2d(h, params["conv_res"], abits=a_bits)
    h = h + quant_conv2d(xh, params["conv_skip"], abits=a_bits)

    # --- QuantBasicTransformerBlock (tokens: (B, H*W, C), no transpose from NHWC) ---
    z = h.reshape(B, H * W, 8)

    # self-attention (attn1): fused q/k/v projection, quantized attention
    zn = layer_norm(z)
    qkv = quant_linear_nd(zn, params["to_qkv1"], abits=a_bits)
    q, k, v = qkv[..., 0:8], qkv[..., 8:16], qkv[..., 16:24]
    a = quant_attention(q, k, v, heads=2, abits=a_bits, sm_abit=sm_abit)
    z = z + quant_linear_nd(a, params["to_out1"], abits=a_bits)

    # cross-attention (attn2) against `context`: fused k/v projection
    zn = layer_norm(z)
    q = quant_linear_nd(zn, params["to_q2"], abits=a_bits)
    kv = quant_linear_nd(context, params["to_kv2"], abits=a_bits)
    k, v = kv[..., 0:8], kv[..., 8:16]
    a = quant_attention(q, k, v, heads=2, abits=a_bits, sm_abit=sm_abit)
    z = z + quant_linear_nd(a, params["to_out2"], abits=a_bits)

    # feed-forward
    zn = layer_norm(z)
    f = quant_linear_nd(zn, params["ff1"], abits=a_bits, act="gelu")
    z = z + quant_linear_nd(f, params["ff2"], abits=a_bits)

    h = z.reshape(B, H, W, 8)

    # --- output projection back to in_channels ---
    out = quant_conv2d(h, params["conv_out"], abits=a_bits)
    return out.transpose(0, 3, 1, 2)      # back to NCHW at the API boundary


# TODO(synk): running-stat (EMA min/max) calibration and grad-checkpoint toggles are
# training-time bookkeeping with no forward-pass compute; not modeled in the kernel.

if __name__ == "__main__":
    key = jax.random.PRNGKey(0)
    k_params, k_x, k_ctx = jax.random.split(key, 3)

    params = init_params(k_params, wbits=8)
    x = jax.random.normal(k_x, (2, 4, 16, 16), jnp.float32)        # NCHW, in_channels=4
    timesteps = jnp.array([10.0, 500.0], jnp.float32)
    context = jax.random.normal(k_ctx, (2, 8, 16), jnp.float32)    # (B, seq, ctx_dim)

    out = quant_model_forward(params, x, timesteps, context, sm_abit=8)
    out = jax.block_until_ready(out)
    assert out.shape == (2, 4, 16, 16) and out.dtype == jnp.float32
    assert bool(jnp.all(jnp.isfinite(out)))
    print("KERNEL_OK")
</pallas_src>

<mosaic_0001>
module attributes {stable_mosaic.version = 11 : i64} {
  func.func @quant_matmul_kernel(%arg0: i32, %arg1: memref<2x32xf32, #tpu.memory_space<vmem>>, %arg2: memref<32x128xbf16, #tpu.memory_space<vmem>>, %arg3: memref<1x128xf32, #tpu.memory_space<vmem>>, %arg4: memref<3xf32, #tpu.memory_space<smem>>, %arg5: memref<2x128xf32, #tpu.memory_space<vmem>>) attributes {dimension_semantics = [#tpu.dimension_semantics<parallel>], iteration_bounds = array<i64: 1>, scalar_prefetch = 0 : i64, scratch_operands = 0 : i64, tpu.core_type = #tpu.core_type<tc>, window_params = [{transform_indices = @transform_0, window_bounds = array<i64: 2, 32>}, {pipeline_mode = #tpu.pipeline_mode<synchronous>, transform_indices = @transform_1, window_bounds = array<i64: 32, 128>}, {pipeline_mode = #tpu.pipeline_mode<synchronous>, transform_indices = @transform_2, window_bounds = array<i64: 1, 128>}, {transform_indices = @transform_3, window_bounds = array<i64: 3>}, {transform_indices = @transform_4, window_bounds = array<i64: 2, 128>}]} {
    %c0 = arith.constant 0 : index
    %0 = memref.load %arg4[%c0] : memref<3xf32, #tpu.memory_space<smem>>
    %c1 = arith.constant 1 : index
    %1 = memref.load %arg4[%c1] : memref<3xf32, #tpu.memory_space<smem>>
    %c2 = arith.constant 2 : index
    %2 = memref.load %arg4[%c2] : memref<3xf32, #tpu.memory_space<smem>>
    %c0_0 = arith.constant 0 : index
    %c0_1 = arith.constant 0 : index
    %3 = vector.load %arg1[%c0_0, %c0_1] : memref<2x32xf32, #tpu.memory_space<vmem>>, vector<2x32xf32>
    %4 = vector.broadcast %0 : f32 to vector<2x32xf32>
    %5 = arith.mulf %3, %4 : vector<2x32xf32>
    %6 = math.roundeven %5 : vector<2x32xf32>
    %7 = vector.broadcast %2 : f32 to vector<2x32xf32>
    %8 = arith.addf %6, %7 : vector<2x32xf32>
    %cst = arith.constant 0.000000e+00 : f32
    %cst_2 = arith.constant 2.550000e+02 : f32
    %9 = vector.broadcast %cst : f32 to vector<2x32xf32>
    %10 = arith.maximumf %9, %8 : vector<2x32xf32>
    %11 = vector.broadcast %cst_2 : f32 to vector<2x32xf32>
    %12 = arith.minimumf %11, %10 : vector<2x32xf32>
    %13 = vector.broadcast %2 : f32 to vector<2x32xf32>
    %14 = arith.subf %12, %13 : vector<2x32xf32>
    %15 = vector.broadcast %1 : f32 to vector<2x32xf32>
    %16 = arith.mulf %14, %15 : vector<2x32xf32>
    %17 = arith.truncf %16 : vector<2x32xf32> to vector<2x32xbf16>
    %c0_3 = arith.constant 0 : index
    %c0_4 = arith.constant 0 : index
    %18 = vector.load %arg2[%c0_3, %c0_4] : memref<32x128xbf16, #tpu.memory_space<vmem>>, vector<32x128xbf16>
    %cst_5 = arith.constant dense<0.000000e+00> : vector<2x128xf32>
    %19 = tpu.matmul %17, %18, %cst_5 {dimension_numbers = #tpu.dot_dimension_numbers<[1], [0], [0], [1], [0, 0, 1, 1], [], []>} : vector<2x32xbf16>, vector<32x128xbf16>, vector<2x128xf32> -> vector<2x128xf32>
    %c0_6 = arith.constant 0 : index
    %c0_7 = arith.constant 0 : index
    %20 = vector.load %arg3[%c0_6, %c0_7] : memref<1x128xf32, #tpu.memory_space<vmem>>, vector<1x128xf32>
    %21 = vector.broadcast %20 : vector<1x128xf32> to vector<2x128xf32>
    %22 = arith.addf %19, %21 : vector<2x128xf32>
    %23 = arith.negf %22 : vector<2x128xf32>
    %24 = math.exp %23 : vector<2x128xf32>
    %cst_8 = arith.constant 1.000000e+00 : f32
    %25 = vector.broadcast %cst_8 : f32 to vector<2x128xf32>
    %26 = arith.addf %25, %24 : vector<2x128xf32>
    %27 = arith.divf %25, %26 : vector<2x128xf32>
    %28 = arith.mulf %22, %27 : vector<2x128xf32>
    %c0_9 = arith.constant 0 : index
    %c0_10 = arith.constant 0 : index
    %29 = vector.load %arg5[%c0_9, %c0_10] : memref<2x128xf32, #tpu.memory_space<vmem>>, vector<2x128xf32>
    tpu.vector_store %arg5[%c0_9, %c0_10], %28 {strides = array<i32>} : memref<2x128xf32, #tpu.memory_space<vmem>>, vector<2x128xf32>,
    return
  }
  func.func @transform_0(%arg0: i32) -> (i32, i32) {
    %c0_i32 = arith.constant 0 : i32
    %c0_i32_0 = arith.constant 0 : i32
    return %arg0, %c0_i32 : i32, i32
  }
  func.func @transform_1(%arg0: i32) -> (i32, i32) {
    %c0_i32 = arith.constant 0 : i32
    %c0_i32_0 = arith.constant 0 : i32
    %c0_i32_1 = arith.constant 0 : i32
    return %c0_i32, %c0_i32_0 : i32, i32
  }
  func.func @transform_2(%arg0: i32) -> (i32, i32) {
    %c0_i32 = arith.constant 0 : i32
    %c0_i32_0 = arith.constant 0 : i32
    %c0_i32_1 = arith.constant 0 : i32
    return %c0_i32, %c0_i32_0 : i32, i32
  }
  func.func @transform_3(%arg0: i32) -> i32 {
    %c0_i32 = arith.constant 0 : i32
    %c0_i32_0 = arith.constant 0 : i32
    return %c0_i32 : i32
  }
  func.func @transform_4(%arg0: i32) -> (i32, i32) {
    %c0_i32 = arith.constant 0 : i32
    %c0_i32_0 = arith.constant 0 : i32
    return %arg0, %c0_i32 : i32, i32
  }
}

</mosaic_0001>

<llo_original>
// kernel: tpu_custom_call.1
$region0: #{tpu_custom_call.1}
  #allocation0 [shape = 'u32[]', space=smem, size = 0x4, offset = 0x4, fixed_abs, tag = 'smem constant byte address 0x4 - core index']
  #allocation1 [shape = 'u32[144,128]{1,0:T(1,128)}', space=vmem, size = 0x12000, scoped, tag = 'internal scratch']
  %s0 = inlined_call_operand.hbm [shape: f32[2,32], index: 0, kind: input, shape index: {}]
  %s1 = inlined_call_operand.hbm [shape: bf16[32,128], index: 1, kind: input, shape index: {}]
  %s2 = inlined_call_operand.vmem [shape: f32[1,128], index: 2, kind: input, shape index: {}]
  %s3 = inlined_call_operand.vmem [shape: f32[3], index: 3, kind: input, shape index: {}]
  %s4 = inlined_call_operand.hbm [shape: f32[2,128], index: 4, kind: output, shape index: {}]
  %s5 = sld [smem:[#allocation0]]
  $region38: #{tpu_custom_call.1} parent=0
    _
  %s7 = ssub.s32 1, %s5
  %s8 = scalar_select 0, %s7, %s5
  $region1: #{tpu_custom_call.1} parent=0
    #allocation2 [shape = 'u8[1024]{0}', space=vmem, size = 0x400, scoped, tag = 'input window, operand 0, single buffered']
    #allocation3 [shape = 's32[1]{0}', space=sflag, size = 0x4, scoped, tag = 'scoped memory for tpu_custom_call.1']
    #allocation4 [shape = 's32[1]{0}', space=sflag, size = 0x4, scoped, tag = 'scoped memory for tpu_custom_call.1']
    #allocation5 [shape = 's32[1]{0}', space=sflag, size = 0x4, scoped, tag = 'scoped memory for tpu_custom_call.1']
    #allocation6 [shape = 'u8[8192]{0}', space=vmem, size = 0x2000, scoped, tag = 'input window, operand 1, single buffered']
    #allocation7 [shape = 's32[1]{0}', space=sflag, size = 0x4, scoped, tag = 'scoped memory for tpu_custom_call.1']
    #allocation8 [shape = 'u8[512]{0}', space=smem, size = 0x200, scoped, tag = 'input window, operand 3, single buffered']
    #allocation9 [shape = 'u8[1024]{0}', space=vmem, size = 0x400, scoped, tag = 'output window, operand 0, single buffered']
    %9 = vsyncpa [#allocation3], 0
    %10 = vsyncpa [#allocation7], 0
    %11 = vsyncpa [#allocation5], 0
    %12 = vsyncpa [#allocation4], 0
    // Predicated region
    $region2: #{tpu_custom_call.1} parent=1 // pred_check
      _
    $region3: #{tpu_custom_call.1} parent=1 // pred_check_branch
      %14 = sbr.rel (0) target = $region5
    $region4: #{tpu_custom_call.1} parent=1 // pred_region
      %s16 = ssub.s32 32, 32
      %17 = vsyncadd [#allocation3], %s16
      %s19 = sshll.u32 [#allocation2], 4
      %s20 = int_to_ptr.vmem [resolvable:$true] %s19
      %22 = dma.hbm_to_vmem [thread:$0]  %s0, 32, %s20, [#allocation3]
    $region5: #{tpu_custom_call.1} parent=1 // pred_fallthru
      _
    // Predicated region
    $region6: #{tpu_custom_call.1} parent=1 // pred_check
      _
    $region7: #{tpu_custom_call.1} parent=1 // pred_check_branch
      %24 = sbr.rel (0) target = $region9
    $region8: #{tpu_custom_call.1} parent=1 // pred_region
      %s26 = ssub.s32 256, 256
      %27 = vsyncadd [#allocation7], %s26
      %s28 = sshll.u32 [#allocation6], 4
      %s29 = int_to_ptr.vmem [resolvable:$true] %s28
      %34 = dma.hbm_to_vmem [thread:$0]  %s1, 256, %s29, [#allocation7], 64, 64, 4
    $region9: #{tpu_custom_call.1} parent=1 // pred_fallthru
      _
    // Predicated region
    $region10: #{tpu_custom_call.1} parent=1 // pred_check
      _
    $region11: #{tpu_custom_call.1} parent=1 // pred_check_branch
      %36 = sbr.rel (0) target = $region13
    $region12: #{tpu_custom_call.1} parent=1 // pred_region
      _
    $region13: #{tpu_custom_call.1} parent=1 // pred_fallthru
      _
    // Predicated region
    $region14: #{tpu_custom_call.1} parent=1 // pred_check
      _
    $region15: #{tpu_custom_call.1} parent=1 // pred_check_branch
      %38 = sbr.rel (0) target = $region17
    $region16: #{tpu_custom_call.1} parent=1 // pred_region
      %s40 = ssub.s32 16, 16
      %41 = vsyncadd [#allocation5], %s40
      %s43 = sshll.u32 %s3, 4
      %s44 = int_to_ptr.vmem [resolvable:$true] %s43
      %46 = dma.vmem_to_smem %s44, 16, [#allocation8], [#allocation5]
    $region17: #{tpu_custom_call.1} parent=1 // pred_fallthru
      _
    // Predicated region
    $region18: #{tpu_custom_call.1} parent=1 // pred_check
      _
    $region19: #{tpu_custom_call.1} parent=1 // pred_check_branch
      %48 = sbr.rel (0) target = $region21
    $region20: #{tpu_custom_call.1} parent=1 // pred_region
      %49 = dma.done [#allocation3], 32
    $region21: #{tpu_custom_call.1} parent=1 // pred_fallthru
      _
    // Predicated region
    $region22: #{tpu_custom_call.1} parent=1 // pred_check
      _
    $region23: #{tpu_custom_call.1} parent=1 // pred_check_branch
      %51 = sbr.rel (0) target = $region25
    $region24: #{tpu_custom_call.1} parent=1 // pred_region
      %52 = dma.done [#allocation7], 256
    $region25: #{tpu_custom_call.1} parent=1 // pred_fallthru
      _
    // Predicated region
    $region26: #{tpu_custom_call.1} parent=1 // pred_check
      _
    $region27: #{tpu_custom_call.1} parent=1 // pred_check_branch
      %54 = sbr.rel (0) target = $region29
    $region28: #{tpu_custom_call.1} parent=1 // pred_region
      %55 = dma.done [#allocation5], 16
    $region29: #{tpu_custom_call.1} parent=1 // pred_fallthru
      _
    %56 = sfence
    %s58 = sld [smem:[#allocation8]]
    %s59 = sld [smem:[#allocation8 + $0x1]]
    %s60 = sld [smem:[#allocation8 + $0x2]]
    %v61 = vld [vmem:[#allocation2] sm:$0x3]
    %v62 = vstv %s58
    %v63 = vmul.f32 %v61, %v62
    %v64 = vround.ne.pseudo %v63
    %v65 = vstv %s60
    %v66 = vadd.f32 %v64, %v65
    %v67 = vmax.f32 %v66, 0.0
    %v68 = vmin.f32 %v67, 255.0
    %v69 = vsub.f32 %v68, %v65
    %v70 = vstv %s59
    %v71 = vmul.f32 %v69, %v70
    %v72 = vpack.c.bf16 %v71, %v71
    %v73 = vld [vmem:[#allocation6] sm:$0xf]
    %v74 = vld [vmem:[#allocation6 + $0x4] sm:$0xf]
    %v75 = vld [vmem:[#allocation6 + $0x8] sm:$0xf]
    %v76 = vld [vmem:[#allocation6 + $0xc] sm:$0xf]
    %v77 = vld [vmem:[%s2] sm:$0x1]
    %v79 = vlaneseq
    %v80 = vshrl.u32 %v79, 7
    %v81 = vsub.s32 0, %v80
    %v82 = vrot.slane %v77, %v81
    %v88 = vunpack.c.l.b16 %v73
    %v89 = vunpack.c.l.b16 %v74
    %v90 = vunpack.c.l.b16 %v75
    %v91 = vunpack.c.l.b16 %v76
    %v92 = vpack.c.b16 %v89, %v88
    %v93 = vpack.c.b16 %v91, %v90
    %vm96 = vcmask 261120
    %v98 = vsel %vm96, %v72, 0
    %100 = vmatprep.subr.bf16.mxu0 0
    %101 = vmatpush1.bf16.msra.mxu0 0
    %102 = vmatprep.subr.bf16.mxu0 0
    %103 = vmatpush1.bf16.msra.mxu0 0
    %104 = vmatprep.subr.bf16.mxu0 0
    %105 = vmatpush1.bf16.msra.mxu0 0
    %106 = vmatprep.subr.bf16.mxu0 0
    %107 = vmatpush1.bf16.msra.mxu0 0
    %108 = vmatprep.subr.bf16.mxu0 0
    %109 = vmatpush1.bf16.msra.mxu0 0
    %110 = vmatprep.subr.bf16.mxu0 0
    %111 = vmatpush1.bf16.msra.mxu0 0
    %112 = vmatprep.subr.bf16.mxu0 0
    %113 = vmatpush1.bf16.msra.mxu0 %v93
    %114 = vmatprep.subr.bf16.mxu0 0
    %115 = vmatpush1.bf16.msra.mxu0 %v92
    %116 = vmatprep.subr.bf16.mxu0 0
    %117 = vmatpush2.bf16.msra.mxu0 0
    %118 = vmatprep.subr.bf16.mxu0 0
    %119 = vmatpush2.bf16.msra.mxu0 0
    %120 = vmatprep.subr.bf16.mxu0 0
    %121 = vmatpush2.bf16.msra.mxu0 0
    %122 = vmatprep.subr.bf16.mxu0 0
    %123 = vmatpush2.bf16.msra.mxu0 0
    %124 = vmatprep.subr.bf16.mxu0 0
    %125 = vmatpush2.bf16.msra.mxu0 0
    %126 = vmatprep.subr.bf16.mxu0 0
    %127 = vmatpush2.bf16.msra.mxu0 0
    %128 = vmatprep.subr.bf16.mxu0 0
    %129 = vmatpush2.bf16.msra.mxu0 0
    %130 = vmatprep.subr.bf16.mxu0 0
    %131 = vmatpush2.bf16.msra.mxu0 0
    %132 = vmatprep.mubr.bf16.mxu0 0
    %133 = vmatmul.mubr.bf16.gmra.mxu0 %v98
    %v134 = vpop.f32.mrf.mxu0
    %v135 = vadd.f32 %v82, %v134
    %v136 = vpop.f32.mrf.mxu0
    %v137 = vpop.f32.mrf.mxu0
    %v138 = vpop.f32.mrf.mxu0
    %139 = vdwg.mxu0
    %v140 = vxor.u32 %v135, 2147483648
    %v141 = vmul.f32 %v140, 1.442695
    %v142 = vpow.pop %v141
    %v143 = vadd.f32 %v142, 1.0
    %v144 = vrcp.pop %v143
    %v145 = vmul.f32 1.0, %v144
    %v146 = vmul.f32 %v135, %v145
    %147 = vst [vmem:[#allocation9] sm:$0x3] %v146
    // Predicated region
    $region30: #{tpu_custom_call.1} parent=1 // pred_check
      _
    $region31: #{tpu_custom_call.1} parent=1 // pred_check_branch
      %149 = sbr.rel (0) target = $region33
    $region32: #{tpu_custom_call.1} parent=1 // pred_region
      %s151 = ssub.s32 32, 32
      %152 = vsyncadd [#allocation4], %s151
      %s154 = sshll.u32 [#allocation9], 4
      %s155 = int_to_ptr.vmem [resolvable:$true] %s154
      %157 = dma.vmem_to_hbm [thread:$0]  %s155, 32, %s4, [#allocation4]
    $region33: #{tpu_custom_call.1} parent=1 // pred_fallthru
      _
    // Predicated region
    $region34: #{tpu_custom_call.1} parent=1 // pred_check
      _
    $region35: #{tpu_custom_call.1} parent=1 // pred_check_branch
      %159 = sbr.rel (0) target = $region37
    $region36: #{tpu_custom_call.1} parent=1 // pred_region
      %160 = dma.done [#allocation4], 32
    $region37: #{tpu_custom_call.1} parent=1 // pred_fallthru
      _
    %161 = vsyncpa [#allocation3], 1
    %162 = vsyncpa [#allocation7], 1
    %163 = vsyncpa [#allocation4], 1
    %164 = vsyncpa [#allocation5], 1

</llo_original>
